<compile_context>
chip_gen: v5e
topology: v5e:2x2
jax: 0.10.0
libtpu: 0.0.40
codegen_flags: <defaults>
</compile_context>

<pallas_src>
import jax
import jax.numpy as jnp
from jax.experimental import pallas as pl
from jax.experimental.pallas import tpu as pltpu

_LANE = 128
_SUBLANE = 8
_TARGET_BLOCK_BYTES = 2 * 1024 * 1024   # ~2 MiB per block (x4 live, double-buffered)


def _moo_identity_kernel(grads_ref, out_ref):
    # Hot path: dense full-tile copy of one (bk, bc) slab.
    out_ref[...] = grads_ref[...]


def moo_method_forward(grads, inputs=None, outputs=None):
    """Pallas equivalent of MOOMethod.forward.

    Args:
      grads:   (K, D) array of per-task gradients.
      inputs:  unused (requires_input = False on the base class).
      outputs: unused.

    Returns:
      (K, D) array of new task gradients (materialized identity of the inputs).
    """
    del inputs, outputs  # not used by the base-class contract
    K, D = grads.shape
    itemsize = grads.dtype.itemsize

    # ---- rows per block (K axis) ---------------------------------------------
    # K (number of tasks) is small in MTL, so normally bk == K ("block dim ==
    # array dim" satisfies the (8, 128) rule).  Tile K only if it is huge.
    max_block_rows = max(
        _SUBLANE, (_TARGET_BLOCK_BYTES // (_LANE * itemsize)) // _SUBLANE * _SUBLANE
    )
    bk = K if K <= max_block_rows else max_block_rows
    n_bk = pl.cdiv(K, bk)

    # ---- lanes per block (D axis) --------------------------------------------
    if D < _LANE:
        bc = D  # full-dim block; tiny data, single block along D
    else:
        # Lane-dense block: multiple of 128 lanes, ~2 MiB per (bk, bc) block.
        target_lanes = max(_LANE, _TARGET_BLOCK_BYTES // (bk * itemsize))
        bc = (target_lanes // _LANE) * _LANE
        bc = min(bc, (D // _LANE) * _LANE)
        # Prefer >= 2 grid steps when there is enough data so a "parallel"
        # grid axis can be sharded across both v7x TensorCores.
        if n_bk * pl.cdiv(D, bc) == 1 and D >= 2 * _LANE:
            bc = max(_LANE, pl.cdiv(D, 2 * _LANE) * _LANE)
    n_bc = pl.cdiv(D, bc)

    return pl.pallas_call(
        _moo_identity_kernel,
        out_shape=jax.ShapeDtypeStruct((K, D), grads.dtype),
        grid_spec=pltpu.PrefetchScalarGridSpec(
            num_scalar_prefetch=0,
            grid=(n_bk, n_bc),
            in_specs=[pl.BlockSpec((bk, bc), lambda i, j: (i, j))],
            out_specs=pl.BlockSpec((bk, bc), lambda i, j: (i, j)),
        ),
        compiler_params=pltpu.CompilerParams(
            dimension_semantics=("parallel", "parallel"),
        ),
        cost_estimate=pl.CostEstimate(
            flops=0,
            transcendentals=0,
            bytes_accessed=2 * K * D * itemsize,
        ),
    )(grads)


if __name__ == "__main__":
    key = jax.random.PRNGKey(0)
    K, D = 4, 256  # K tasks, gradient dimension D
    k_g, k_in, k_out = jax.random.split(key, 3)

    grads = jax.random.normal(k_g, (K, D), dtype=jnp.float32)
    inputs = jax.random.normal(k_in, (2, 32), dtype=jnp.float32)    # unused
    outputs = jax.random.normal(k_out, (K, 2), dtype=jnp.float32)   # unused

    new_grads = jax.block_until_ready(moo_method_forward(grads, inputs, outputs))
    assert new_grads.shape == grads.shape
    assert new_grads.dtype == grads.dtype
    assert bool(jnp.array_equal(new_grads, grads))

    # Ragged D (not a multiple of 128) exercises the masked edge-block path.
    grads2 = jax.random.normal(k_g, (3, 1000), dtype=jnp.float32)
    new_grads2 = jax.block_until_ready(moo_method_forward(grads2))
    assert new_grads2.shape == grads2.shape
    assert bool(jnp.array_equal(new_grads2, grads2))

    # Small D (< 128) exercises the full-dim block path.
    grads3 = jax.random.normal(k_g, (5, 48), dtype=jnp.float32)
    new_grads3 = jax.block_until_ready(moo_method_forward(grads3))
    assert bool(jnp.array_equal(new_grads3, grads3))

    print("KERNEL_OK")
</pallas_src>

<mosaic_0001>
module attributes {stable_mosaic.version = 11 : i64} {
  func.func @_moo_identity_kernel(%arg0: i32, %arg1: i32, %arg2: memref<4x128xf32, #tpu.memory_space<vmem>>, %arg3: memref<4x128xf32, #tpu.memory_space<vmem>>) attributes {dimension_semantics = [#tpu.dimension_semantics<parallel>, #tpu.dimension_semantics<parallel>], iteration_bounds = array<i64: 1, 2>, scalar_prefetch = 0 : i64, scratch_operands = 0 : i64, tpu.core_type = #tpu.core_type<tc>, window_params = [{transform_indices = @transform_0, window_bounds = array<i64: 4, 128>}, {transform_indices = @transform_1, window_bounds = array<i64: 4, 128>}]} {
    %c0 = arith.constant 0 : index
    %c0_0 = arith.constant 0 : index
    %0 = vector.load %arg2[%c0, %c0_0] : memref<4x128xf32, #tpu.memory_space<vmem>>, vector<4x128xf32>
    %c0_1 = arith.constant 0 : index
    %c0_2 = arith.constant 0 : index
    %1 = vector.load %arg3[%c0_1, %c0_2] : memref<4x128xf32, #tpu.memory_space<vmem>>, vector<4x128xf32>
    tpu.vector_store %arg3[%c0_1, %c0_2], %0 {strides = array<i32>} : memref<4x128xf32, #tpu.memory_space<vmem>>, vector<4x128xf32>,
    return
  }
  func.func @transform_0(%arg0: i32, %arg1: i32) -> (i32, i32) {
    %c0_i32 = arith.constant 0 : i32
    return %arg0, %arg1 : i32, i32
  }
  func.func @transform_1(%arg0: i32, %arg1: i32) -> (i32, i32) {
    %c0_i32 = arith.constant 0 : i32
    return %arg0, %arg1 : i32, i32
  }
}

</mosaic_0001>

<llo_original>
// kernel: tpu_custom_call.1
$region0: #{tpu_custom_call.1}
  #allocation0 [shape = 'u32[]', space=smem, size = 0x4, offset = 0x4, fixed_abs, tag = 'smem constant byte address 0x4 - core index']
  #allocation1 [shape = 'u32[72,128]{1,0:T(1,128)}', space=vmem, size = 0x9000, scoped, tag = 'internal scratch']
  %s0 = inlined_call_operand.hbm [shape: f32[4,256], index: 0, kind: input, shape index: {}]
  %s1 = inlined_call_operand.hbm [shape: f32[4,256], index: 1, kind: output, shape index: {}]
  %s2 = sld [smem:[#allocation0]]
  $region41: #{tpu_custom_call.1} parent=0
    _
  %s4 = ssub.s32 1, %s2
  %s5 = scalar_select 0, %s4, %s2
  $region1: #{tpu_custom_call.1} parent=0
    #allocation2 [shape = 'u8[4096]{0}', space=vmem, size = 0x1000, scoped, tag = 'input window, operand 0']
    #allocation3 [shape = 's32[2]{0}', space=sflag, size = 0x8, scoped, tag = 'scoped memory for tpu_custom_call.1']
    #allocation4 [shape = 's32[2]{0}', space=sflag, size = 0x8, scoped, tag = 'scoped memory for tpu_custom_call.1']
    #allocation5 [shape = 'u8[4096]{0}', space=vmem, size = 0x1000, scoped, tag = 'output window, operand 0']
    %6 = vsyncpa [#allocation3], 0
    %s7 = scalar_lea.sflag [#allocation3], 1
    %8 = vsyncpa %s7, 0
    %9 = vsyncpa [#allocation4], 0
    %s10 = scalar_lea.sflag [#allocation4], 1
    %11 = vsyncpa %s10, 0
    loop: start=0, step=1, limit=4
    $region2: #{tpu_custom_call.1} parent=1 // loop_pre_header
      _
    $region3: #{tpu_custom_call.1} parent=1 // loop_header
      %s13 = sphi 0, %s17
      %p14 = scmp.ge.s32.totalorder %s13, 4
      %s20 = sphi 0, %s32
      %s21 = sphi 0, %s28
      %s22 = sphi 0, %s20
      %s23 = sphi 0, %s21
      %s24 = sphi 0, %s22
      %s25 = sphi 0, %s23
      %s37 = sphi 0, %s39
      %s40 = sphi 0, %s37
      %s41 = sphi 0, %s40
      %s57 = sphi 0, %s41
      %s65 = sphi 0, %s67
      %s68 = sphi 0, %s65
      %s69 = sphi 0, %s68
      %s85 = sphi 0, %s69
    $region4: #{tpu_custom_call.1} parent=1 // loop_header_branch
      %16 = sbr.rel (%p14) target = $region8
    $region5: #{tpu_custom_call.1} parent=1 // loop_body
      %s18 = ssub.s32 %s13, 1
      %s19 = ssub.s32 %s13, 2
      %s26 = sadd.s32 1, %s21
      %p27 = scmp.ge.s32.totalorder %s26, 2
      %s28 = scalar_select %p27, 0, %s26
      %s29 = sadd.s32 1, %s20
      %s30 = scalar_select %p27, %s29, %s20
      %p31 = scmp.ge.s32.totalorder %s30, 1
      %s32 = scalar_select %p31, 0, %s30
      %s33 = ssub.s32 %s20, %s32
      %s34 = ssub.s32 %s21, %s28
      %s35 = sor.u32 %s33, %s34
      %p36 = scmp.eq.s32.totalorder %s35, 0
      %s38 = sadd.s32 %s37, 1
      %s39 = scalar_select %p36, %s37, %s38
      %p42 = pneg %p36
      %p43 = scmp.eq.s32.totalorder %s13, 1
      %p44 = por %p42, %p43
      %p45 = scmp.ne.s32.totalorder %s37, %s40
      %p46 = scmp.eq.s32.totalorder %s13, 0
      %p47 = por %p45, %p46
      %p48 = scmp.ne.s32.totalorder %s37, %s40
      %p49 = scmp.eq.s32.totalorder %s18, 1
      %p50 = por %p48, %p49
      %p51 = scmp.ne.s32.totalorder %s40, %s41
      %p52 = scmp.eq.s32.totalorder %s18, 0
      %p53 = por %p51, %p52
      %p54 = scmp.ne.s32.totalorder %s40, %s41
      %p55 = scmp.eq.s32.totalorder %s19, 1
      %p56 = por %p54, %p55
      %p58 = scmp.ne.s32.totalorder %s41, %s57
      %p59 = scmp.eq.s32.totalorder %s19, 0
      %p60 = por %p58, %p59
      %s61 = ssub.s32 %s20, %s32
      %s62 = ssub.s32 %s21, %s28
      %s63 = sor.u32 %s61, %s62
      %p64 = scmp.eq.s32.totalorder %s63, 0
      %s66 = sadd.s32 %s65, 1
      %s67 = scalar_select %p64, %s65, %s66
      %p70 = pneg %p64
      %p71 = scmp.eq.s32.totalorder %s13, 1
      %p72 = por %p70, %p71
      %p73 = scmp.ne.s32.totalorder %s65, %s68
      %p74 = scmp.eq.s32.totalorder %s13, 0
      %p75 = por %p73, %p74
      %p76 = scmp.ne.s32.totalorder %s65, %s68
      %p77 = scmp.eq.s32.totalorder %s18, 1
      %p78 = por %p76, %p77
      %p79 = scmp.ne.s32.totalorder %s68, %s69
      %p80 = scmp.eq.s32.totalorder %s18, 0
      %p81 = por %p79, %p80
      %p82 = scmp.ne.s32.totalorder %s68, %s69
      %p83 = scmp.eq.s32.totalorder %s19, 1
      %p84 = por %p82, %p83
      %p86 = scmp.ne.s32.totalorder %s69, %s85
      %p87 = scmp.eq.s32.totalorder %s19, 0
      %p88 = por %p86, %p87
      %p89 = scmp.le.s32.totalorder 1, %s13
      %p90 = scmp.lt.s32.totalorder %s13, 3
      %p91 = pnand %p89, %p90
      %p92 = pneg %p91
      // Predicated region
      $region9: #{tpu_custom_call.1} parent=5 // pred_check
        _
      $region10: #{tpu_custom_call.1} parent=5 // pred_check_branch
        %94 = sbr.rel (%p91) target = $region12
      $region11: #{tpu_custom_call.1} parent=5 // pred_region
        %s95 = ssub.s32 %s13, 1
      $region12: #{tpu_custom_call.1} parent=5 // pred_fallthru
        _
      %p96 = scmp.lt.s32.totalorder %s13, 2
      // Predicated region
      $region13: #{tpu_custom_call.1} parent=5 // pred_check
        %p97 = pneg %p96
      $region14: #{tpu_custom_call.1} parent=5 // pred_check_branch
        %99 = sbr.rel (%p97) target = $region16
      $region15: #{tpu_custom_call.1} parent=5 // pred_region
        // Predicated region
        $region17: #{tpu_custom_call.1} parent=15 // pred_check
          %p100 = pneg %p47
        $region18: #{tpu_custom_call.1} parent=15 // pred_check_branch
          %102 = sbr.rel (%p100) target = $region20
        $region19: #{tpu_custom_call.1} parent=15 // pred_region
          %s103 = sand.u32 %s37, 1
          %s104 = scalar_lea.sflag [#allocation3], %s103
          %s105 = sand.u32 %s37, 1
          %s106 = smul.addr %s105, 4
          %s107 = scalar_lea.vmem [#allocation2], %s106
          %109 = vsyncadd %s104, 0
          %s110 = smul.addr %s20, 2
          %s111 = sadd.s32 %s21, %s110
          %s112 = smul.addr %s111, 4
          %s113 = scalar_lea.hbm %s0, %s112
          %s115 = sshll.u32 %s113, 4
          %s116 = int_to_ptr.hbm [resolvable:$true] %s115
          %s117 = sshll.u32 %s107, 4
          %s118 = int_to_ptr.vmem [resolvable:$true] %s117
          %120 = dma.hbm_to_vmem [thread:$0]  %s116, 64, %s118, %s104
        $region20: #{tpu_custom_call.1} parent=15 // pred_fallthru
          _
      $region16: #{tpu_custom_call.1} parent=5 // pred_fallthru
        _
      %p121 = scmp.le.s32.totalorder 1, %s13
      %p122 = scmp.lt.s32.totalorder %s13, 3
      %p123 = pnand %p121, %p122
      %p124 = pneg %p123
      // Predicated region
      $region21: #{tpu_custom_call.1} parent=5 // pred_check
        _
      $region22: #{tpu_custom_call.1} parent=5 // pred_check_branch
        %126 = sbr.rel (%p123) target = $region24
      $region23: #{tpu_custom_call.1} parent=5 // pred_region
        %s127 = ssub.s32 %s13, 1
        %s128 = sand.u32 %s40, 1
        %s129 = scalar_lea.sflag [#allocation3], %s128
        %s130 = sand.u32 %s40, 1
        %s131 = smul.addr %s130, 4
        %s132 = scalar_lea.vmem [#allocation2], %s131
        // Predicated region
        $region25: #{tpu_custom_call.1} parent=23 // pred_check
          %p133 = pneg %p53
        $region26: #{tpu_custom_call.1} parent=23 // pred_check_branch
          %135 = sbr.rel (%p133) target = $region28
        $region27: #{tpu_custom_call.1} parent=23 // pred_region
          %137 = dma.done %s129, 64
        $region28: #{tpu_custom_call.1} parent=23 // pred_fallthru
          _
        %s138 = sand.u32 %s40, 1
        %s139 = scalar_lea.sflag [#allocation3], %s138
        %s140 = sand.u32 %s40, 1
        %s141 = smul.addr %s140, 4
        %s142 = scalar_lea.vmem [#allocation2], %s141
        %p143 = pneg %p53
        %p144 = pneg %p50
        %p145 = pneg %p81
        %p146 = pneg %p78
        %s147 = sand.u32 %s68, 1
        %s148 = scalar_lea.sflag [#allocation4], %s147
        %s149 = sand.u32 %s68, 1
        %s150 = smul.addr %s149, 4
        %s151 = scalar_lea.vmem [#allocation5], %s150
        %v152 = vld [vmem:[%s132] sm:$0xf]
        %153 = vst [vmem:[%s151] sm:$0xf] %v152
        %s154 = sand.u32 %s68, 1
        %s155 = scalar_lea.sflag [#allocation4], %s154
        %s156 = sand.u32 %s68, 1
        %s157 = smul.addr %s156, 4
        %s158 = scalar_lea.vmem [#allocation5], %s157
        // Predicated region
        $region29: #{tpu_custom_call.1} parent=23 // pred_check
          %p159 = pneg %p78
        $region30: #{tpu_custom_call.1} parent=23 // pred_check_branch
          %161 = sbr.rel (%p159) target = $region32
        $region31: #{tpu_custom_call.1} parent=23 // pred_region
          %163 = vsyncadd %s155, 0
          %s164 = smul.addr %s22, 2
          %s165 = sadd.s32 %s23, %s164
          %s166 = smul.addr %s165, 4
          %s167 = scalar_lea.hbm %s1, %s166
          %s169 = sshll.u32 %s158, 4
          %s170 = int_to_ptr.vmem [resolvable:$true] %s169
          %s171 = sshll.u32 %s167, 4
          %s172 = int_to_ptr.hbm [resolvable:$true] %s171
          %174 = dma.vmem_to_hbm [thread:$0]  %s170, 64, %s172, %s155
        $region32: #{tpu_custom_call.1} parent=23 // pred_fallthru
          _
      $region24: #{tpu_custom_call.1} parent=5 // pred_fallthru
        _
      %p175 = scmp.le.s32.totalorder 2, %s13
      // Predicated region
      $region33: #{tpu_custom_call.1} parent=5 // pred_check
        %p176 = pneg %p175
      $region34: #{tpu_custom_call.1} parent=5 // pred_check_branch
        %178 = sbr.rel (%p176) target = $region36
      $region35: #{tpu_custom_call.1} parent=5 // pred_region
        %s179 = ssub.s32 %s13, 2
        // Predicated region
        $region37: #{tpu_custom_call.1} parent=35 // pred_check
          %p180 = pneg %p84
        $region38: #{tpu_custom_call.1} parent=35 // pred_check_branch
          %182 = sbr.rel (%p180) target = $region40
        $region39: #{tpu_custom_call.1} parent=35 // pred_region
          %s183 = sand.u32 %s69, 1
          %s184 = scalar_lea.sflag [#allocation4], %s183
          %s185 = sand.u32 %s69, 1
          %s186 = smul.addr %s185, 4
          %s187 = scalar_lea.vmem [#allocation5], %s186
          %189 = dma.done %s184, 64
        $region40: #{tpu_custom_call.1} parent=35 // pred_fallthru
          _
      $region36: #{tpu_custom_call.1} parent=5 // pred_fallthru
        _
    $region6: #{tpu_custom_call.1} parent=1 // loop_footer
      %s17 = sadd.s32 1, %s13
    $region7: #{tpu_custom_call.1} parent=1 // loop_footer_branch
      %12 = sbr.rel target = $region3
    $region8: #{tpu_custom_call.1} parent=1 // loop_exit
      _
    %190 = vsyncpa [#allocation3], 1
    %s191 = scalar_lea.sflag [#allocation3], 1
    %192 = vsyncpa %s191, 1
    %193 = vsyncpa [#allocation4], 1
    %s194 = scalar_lea.sflag [#allocation4], 1
    %195 = vsyncpa %s194, 1

</llo_original>
